<compile_context>
chip_gen: v7x
topology: tpu7x:2x2x1
jax: 0.10.0
libtpu: 0.0.40
codegen_flags: <defaults>
</compile_context>

<pallas_src>
import jax
import jax.numpy as jnp
from jax.experimental import pallas as pl
from jax.experimental.pallas import tpu as pltpu

LANE = 128      # lane width (last dim)
SUBLANE = 8     # f32 sublane packing (second-to-last dim)


def _round_up(x, m):
    return ((x + m - 1) // m) * m


def _qnet_kernel(x_ref, w1_ref, b1_ref, w2_ref, b2_ref, w3_ref, b3_ref, o_ref):
    # Layer 1: Linear + ReLU.  MXU runs bf16 x bf16 -> f32 accumulate.
    x = x_ref[...].astype(jnp.bfloat16)
    h1 = jnp.dot(x, w1_ref[...], preferred_element_type=jnp.float32) + b1_ref[...]
    h1 = jnp.maximum(h1, 0.0)                      # f32 on the VPU

    # Layer 2: Linear + ReLU.
    h2 = jnp.dot(h1.astype(jnp.bfloat16), w2_ref[...],
                 preferred_element_type=jnp.float32) + b2_ref[...]
    h2 = jnp.maximum(h2, 0.0)

    # Layer 3: Linear (no activation). Output lane dim is padded to 128 -> dense stores.
    out = jnp.dot(h2.astype(jnp.bfloat16), w3_ref[...],
                  preferred_element_type=jnp.float32) + b3_ref[...]
    o_ref[...] = out.astype(o_ref.dtype)


def qnetwork_forward(x, params, *, batch_tile=256):
    """3-layer MLP forward in one Pallas kernel.

    x: (batch, input_dim) float32
    params: w1 (in,128), b1 (1,128), w2 (128,128), b2 (1,128), w3 (128,out), b3 (1,out)
    returns: (batch, output_dim) float32
    """
    batch, in_dim = x.shape
    hidden = params["w1"].shape[1]
    out_dim = params["w3"].shape[1]

    # Padded (lane/sublane aligned) problem sizes.
    in_p = _round_up(in_dim, LANE)
    out_p = _round_up(out_dim, LANE)
    tb = min(batch_tile, max(SUBLANE, _round_up(batch, SUBLANE)))
    batch_p = _round_up(batch, tb)
    grid = (batch_p // tb,)

    # Zero-pad activations; cast weights to bf16 (zero pads contribute exactly 0).
    x_p = jnp.zeros((batch_p, in_p), jnp.float32).at[:batch, :in_dim].set(x)
    w1 = jnp.zeros((in_p, hidden), jnp.bfloat16).at[:in_dim, :].set(
        params["w1"].astype(jnp.bfloat16))
    b1 = params["b1"].astype(jnp.float32)
    w2 = params["w2"].astype(jnp.bfloat16)
    b2 = params["b2"].astype(jnp.float32)
    w3 = jnp.zeros((hidden, out_p), jnp.bfloat16).at[:, :out_dim].set(
        params["w3"].astype(jnp.bfloat16))
    b3 = jnp.zeros((1, out_p), jnp.float32).at[:, :out_dim].set(
        params["b3"].astype(jnp.float32))

    flops = 2 * batch_p * (in_p * hidden + hidden * hidden + hidden * out_p)
    bytes_accessed = (x_p.size * 4 + batch_p * out_p * 4
                      + w1.size * 2 + w2.size * 2 + w3.size * 2
                      + b1.size * 4 + b2.size * 4 + b3.size * 4)

    # Weights/biases: index_map always (0, 0) -> stay resident in VMEM across the grid.
    resident = lambda shape: pl.BlockSpec(shape, lambda i: (0, 0))

    out = pl.pallas_call(
        _qnet_kernel,
        out_shape=jax.ShapeDtypeStruct((batch_p, out_p), jnp.float32),
        grid=grid,
        in_specs=[
            pl.BlockSpec((tb, in_p), lambda i: (i, 0)),   # x: tiled over batch
            resident((in_p, hidden)),                     # w1
            resident((1, hidden)),                        # b1
            resident((hidden, hidden)),                   # w2
            resident((1, hidden)),                        # b2
            resident((hidden, out_p)),                    # w3
            resident((1, out_p)),                         # b3
        ],
        out_specs=pl.BlockSpec((tb, out_p), lambda i: (i, 0)),
        compiler_params=pltpu.CompilerParams(
            dimension_semantics=("parallel",),            # megacore on v7x
            vmem_limit_bytes=64 << 20,
        ),
        cost_estimate=pl.CostEstimate(
            flops=flops, transcendentals=0, bytes_accessed=bytes_accessed),
    )(x_p, w1, b1, w2, b2, w3, b3)

    return out[:batch, :out_dim]


def init_params(input_dim, output_dim, hidden=128, seed=0):
    """Deterministic init mimicking nn.Linear's uniform(-1/sqrt(fan_in), +1/sqrt(fan_in))."""
    key = jax.random.PRNGKey(seed)
    ks = jax.random.split(key, 6)

    def uniform(k, shape, fan_in):
        bound = 1.0 / jnp.sqrt(jnp.float32(fan_in))
        return jax.random.uniform(k, shape, jnp.float32, -bound, bound)

    return {
        "w1": uniform(ks[0], (input_dim, hidden), input_dim),
        "b1": uniform(ks[1], (1, hidden), input_dim),
        "w2": uniform(ks[2], (hidden, hidden), hidden),
        "b2": uniform(ks[3], (1, hidden), hidden),
        "w3": uniform(ks[4], (hidden, output_dim), hidden),
        "b3": uniform(ks[5], (1, output_dim), hidden),
    }


def reference_forward_f32(x, p):
    """Pure f32 reference (matches the PyTorch module exactly)."""
    h1 = jnp.maximum(x @ p["w1"] + p["b1"], 0.0)
    h2 = jnp.maximum(h1 @ p["w2"] + p["b2"], 0.0)
    return h2 @ p["w3"] + p["b3"]


def reference_forward_bf16(x, p):
    """Reference using the same bf16-weight / f32-accumulate scheme as the kernel."""
    w1 = p["w1"].astype(jnp.bfloat16)
    w2 = p["w2"].astype(jnp.bfloat16)
    w3 = p["w3"].astype(jnp.bfloat16)
    h1 = jnp.maximum(
        jnp.dot(x.astype(jnp.bfloat16), w1, preferred_element_type=jnp.float32)
        + p["b1"], 0.0)
    h2 = jnp.maximum(
        jnp.dot(h1.astype(jnp.bfloat16), w2, preferred_element_type=jnp.float32)
        + p["b2"], 0.0)
    return jnp.dot(h2.astype(jnp.bfloat16), w3,
                   preferred_element_type=jnp.float32) + p["b3"]


if __name__ == "__main__":
    batch, input_dim, output_dim = 2, 16, 4

    key = jax.random.PRNGKey(0)
    x = jax.random.normal(key, (batch, input_dim), jnp.float32)
    params = init_params(input_dim, output_dim, seed=0)

    out = qnetwork_forward(x, params)
    out = jax.block_until_ready(out)
    assert out.shape == (batch, output_dim)

    # Tight check vs a reference that mirrors the kernel's bf16-weight quantization.
    ref_q = reference_forward_bf16(x, params)
    assert jnp.allclose(out, ref_q, atol=1e-4, rtol=1e-4), "mismatch vs bf16 reference"

    # Loose check vs the exact f32 PyTorch-equivalent forward (bf16 weight rounding only).
    ref_f32 = reference_forward_f32(x, params)
    assert jnp.allclose(out, ref_f32, atol=5e-2, rtol=5e-2), "mismatch vs f32 reference"

    print("KERNEL_OK")
</pallas_src>

<mosaic_0001>
module attributes {stable_mosaic.version = 11 : i64} {
  func.func @_qnet_kernel(%arg0: i32, %arg1: memref<8x128xf32, #tpu.memory_space<vmem>>, %arg2: memref<128x128xbf16, #tpu.memory_space<vmem>>, %arg3: memref<1x128xf32, #tpu.memory_space<vmem>>, %arg4: memref<128x128xbf16, #tpu.memory_space<vmem>>, %arg5: memref<1x128xf32, #tpu.memory_space<vmem>>, %arg6: memref<128x128xbf16, #tpu.memory_space<vmem>>, %arg7: memref<1x128xf32, #tpu.memory_space<vmem>>, %arg8: memref<8x128xf32, #tpu.memory_space<vmem>>) attributes {dimension_semantics = [#tpu.dimension_semantics<parallel>], iteration_bounds = array<i64: 1>, scalar_prefetch = 0 : i64, scratch_operands = 0 : i64, tpu.core_type = #tpu.core_type<tc>, window_params = [{transform_indices = @transform_0, window_bounds = array<i64: 8, 128>}, {pipeline_mode = #tpu.pipeline_mode<synchronous>, transform_indices = @transform_1, window_bounds = array<i64: 128, 128>}, {pipeline_mode = #tpu.pipeline_mode<synchronous>, transform_indices = @transform_2, window_bounds = array<i64: 1, 128>}, {pipeline_mode = #tpu.pipeline_mode<synchronous>, transform_indices = @transform_3, window_bounds = array<i64: 128, 128>}, {pipeline_mode = #tpu.pipeline_mode<synchronous>, transform_indices = @transform_4, window_bounds = array<i64: 1, 128>}, {pipeline_mode = #tpu.pipeline_mode<synchronous>, transform_indices = @transform_5, window_bounds = array<i64: 128, 128>}, {pipeline_mode = #tpu.pipeline_mode<synchronous>, transform_indices = @transform_6, window_bounds = array<i64: 1, 128>}, {transform_indices = @transform_7, window_bounds = array<i64: 8, 128>}]} {
    %c0 = arith.constant 0 : index
    %c0_0 = arith.constant 0 : index
    %0 = vector.load %arg1[%c0, %c0_0] : memref<8x128xf32, #tpu.memory_space<vmem>>, vector<8x128xf32>
    %1 = arith.truncf %0 : vector<8x128xf32> to vector<8x128xbf16>
    %c0_1 = arith.constant 0 : index
    %c0_2 = arith.constant 0 : index
    %2 = vector.load %arg2[%c0_1, %c0_2] : memref<128x128xbf16, #tpu.memory_space<vmem>>, vector<128x128xbf16>
    %cst = arith.constant dense<0.000000e+00> : vector<8x128xf32>
    %3 = tpu.matmul %1, %2, %cst {dimension_numbers = #tpu.dot_dimension_numbers<[1], [0], [0], [1], [0, 0, 1, 1], [], []>} : vector<8x128xbf16>, vector<128x128xbf16>, vector<8x128xf32> -> vector<8x128xf32>
    %c0_3 = arith.constant 0 : index
    %c0_4 = arith.constant 0 : index
    %4 = vector.load %arg3[%c0_3, %c0_4] : memref<1x128xf32, #tpu.memory_space<vmem>>, vector<1x128xf32>
    %5 = vector.broadcast %4 : vector<1x128xf32> to vector<8x128xf32>
    %6 = arith.addf %3, %5 : vector<8x128xf32>
    %cst_5 = arith.constant 0.000000e+00 : f32
    %7 = vector.broadcast %cst_5 : f32 to vector<8x128xf32>
    %8 = arith.maximumf %6, %7 : vector<8x128xf32>
    %9 = arith.truncf %8 : vector<8x128xf32> to vector<8x128xbf16>
    %c0_6 = arith.constant 0 : index
    %c0_7 = arith.constant 0 : index
    %10 = vector.load %arg4[%c0_6, %c0_7] : memref<128x128xbf16, #tpu.memory_space<vmem>>, vector<128x128xbf16>
    %cst_8 = arith.constant dense<0.000000e+00> : vector<8x128xf32>
    %11 = tpu.matmul %9, %10, %cst_8 {dimension_numbers = #tpu.dot_dimension_numbers<[1], [0], [0], [1], [0, 0, 1, 1], [], []>} : vector<8x128xbf16>, vector<128x128xbf16>, vector<8x128xf32> -> vector<8x128xf32>
    %c0_9 = arith.constant 0 : index
    %c0_10 = arith.constant 0 : index
    %12 = vector.load %arg5[%c0_9, %c0_10] : memref<1x128xf32, #tpu.memory_space<vmem>>, vector<1x128xf32>
    %13 = vector.broadcast %12 : vector<1x128xf32> to vector<8x128xf32>
    %14 = arith.addf %11, %13 : vector<8x128xf32>
    %cst_11 = arith.constant 0.000000e+00 : f32
    %15 = vector.broadcast %cst_11 : f32 to vector<8x128xf32>
    %16 = arith.maximumf %14, %15 : vector<8x128xf32>
    %17 = arith.truncf %16 : vector<8x128xf32> to vector<8x128xbf16>
    %c0_12 = arith.constant 0 : index
    %c0_13 = arith.constant 0 : index
    %18 = vector.load %arg6[%c0_12, %c0_13] : memref<128x128xbf16, #tpu.memory_space<vmem>>, vector<128x128xbf16>
    %cst_14 = arith.constant dense<0.000000e+00> : vector<8x128xf32>
    %19 = tpu.matmul %17, %18, %cst_14 {dimension_numbers = #tpu.dot_dimension_numbers<[1], [0], [0], [1], [0, 0, 1, 1], [], []>} : vector<8x128xbf16>, vector<128x128xbf16>, vector<8x128xf32> -> vector<8x128xf32>
    %c0_15 = arith.constant 0 : index
    %c0_16 = arith.constant 0 : index
    %20 = vector.load %arg7[%c0_15, %c0_16] : memref<1x128xf32, #tpu.memory_space<vmem>>, vector<1x128xf32>
    %21 = vector.broadcast %20 : vector<1x128xf32> to vector<8x128xf32>
    %22 = arith.addf %19, %21 : vector<8x128xf32>
    %c0_17 = arith.constant 0 : index
    %c0_18 = arith.constant 0 : index
    %23 = vector.load %arg8[%c0_17, %c0_18] : memref<8x128xf32, #tpu.memory_space<vmem>>, vector<8x128xf32>
    tpu.vector_store %arg8[%c0_17, %c0_18], %22 {strides = array<i32>} : memref<8x128xf32, #tpu.memory_space<vmem>>, vector<8x128xf32>,
    return
  }
  func.func @transform_0(%arg0: i32) -> (i32, i32) {
    %c0_i32 = arith.constant 0 : i32
    %c0_i32_0 = arith.constant 0 : i32
    return %arg0, %c0_i32 : i32, i32
  }
  func.func @transform_1(%arg0: i32) -> (i32, i32) {
    %c0_i32 = arith.constant 0 : i32
    %c0_i32_0 = arith.constant 0 : i32
    %c0_i32_1 = arith.constant 0 : i32
    return %c0_i32, %c0_i32_0 : i32, i32
  }
  func.func @transform_2(%arg0: i32) -> (i32, i32) {
    %c0_i32 = arith.constant 0 : i32
    %c0_i32_0 = arith.constant 0 : i32
    %c0_i32_1 = arith.constant 0 : i32
    return %c0_i32, %c0_i32_0 : i32, i32
  }
  func.func @transform_3(%arg0: i32) -> (i32, i32) {
    %c0_i32 = arith.constant 0 : i32
    %c0_i32_0 = arith.constant 0 : i32
    %c0_i32_1 = arith.constant 0 : i32
    return %c0_i32, %c0_i32_0 : i32, i32
  }
  func.func @transform_4(%arg0: i32) -> (i32, i32) {
    %c0_i32 = arith.constant 0 : i32
    %c0_i32_0 = arith.constant 0 : i32
    %c0_i32_1 = arith.constant 0 : i32
    return %c0_i32, %c0_i32_0 : i32, i32
  }
  func.func @transform_5(%arg0: i32) -> (i32, i32) {
    %c0_i32 = arith.constant 0 : i32
    %c0_i32_0 = arith.constant 0 : i32
    %c0_i32_1 = arith.constant 0 : i32
    return %c0_i32, %c0_i32_0 : i32, i32
  }
  func.func @transform_6(%arg0: i32) -> (i32, i32) {
    %c0_i32 = arith.constant 0 : i32
    %c0_i32_0 = arith.constant 0 : i32
    %c0_i32_1 = arith.constant 0 : i32
    return %c0_i32, %c0_i32_0 : i32, i32
  }
  func.func @transform_7(%arg0: i32) -> (i32, i32) {
    %c0_i32 = arith.constant 0 : i32
    %c0_i32_0 = arith.constant 0 : i32
    return %arg0, %c0_i32 : i32, i32
  }
}

</mosaic_0001>

<llo_original>
// kernel: tpu_custom_call.1
$region0: #{tpu_custom_call.1}
  #allocation0 [shape = 'u32[]', space=smem, size = 0x4, offset = 0x4, fixed_abs, tag = 'smem constant byte address 0x4 - core index']
  #allocation1 [shape = 'u32[144,128]{1,0:T(1,128)}', space=vmem, size = 0x12000, scoped, tag = 'internal scratch']
  %s0 = inlined_call_operand.hbm [shape: f32[8,128], index: 0, kind: input, shape index: {}]
  %s1 = inlined_call_operand.hbm [shape: bf16[128,128], index: 1, kind: input, shape index: {}]
  %s2 = inlined_call_operand.hbm [shape: f32[1,128], index: 2, kind: input, shape index: {}]
  %s3 = inlined_call_operand.hbm [shape: bf16[128,128], index: 3, kind: input, shape index: {}]
  %s4 = inlined_call_operand.hbm [shape: f32[1,128], index: 4, kind: input, shape index: {}]
  %s5 = inlined_call_operand.hbm [shape: bf16[128,128], index: 5, kind: input, shape index: {}]
  %s6 = inlined_call_operand.hbm [shape: f32[1,128], index: 6, kind: input, shape index: {}]
  %s7 = inlined_call_operand.hbm [shape: f32[8,128], index: 7, kind: output, shape index: {}]
  %s8 = sld [smem:[#allocation0]]
  $region66: #{tpu_custom_call.1} parent=0
    _
  %s10 = ssub.s32 1, %s8
  %s11 = scalar_select 0, %s10, %s8
  $region1: #{tpu_custom_call.1} parent=0
    #allocation2 [shape = 'u8[4096]{0}', space=vmem, size = 0x1000, scoped, tag = 'input window, operand 0, single buffered']
    #allocation3 [shape = 's32[1]{0}', space=sflag, size = 0x4, scoped, tag = 'scoped memory for tpu_custom_call.1']
    #allocation4 [shape = 's32[1]{0}', space=sflag, size = 0x4, scoped, tag = 'scoped memory for tpu_custom_call.1']
    #allocation5 [shape = 'u8[32768]{0}', space=vmem, size = 0x8000, scoped, tag = 'input window, operand 1, single buffered']
    #allocation6 [shape = 's32[1]{0}', space=sflag, size = 0x4, scoped, tag = 'scoped memory for tpu_custom_call.1']
    #allocation7 [shape = 'u8[512]{0}', space=vmem, size = 0x400, scoped, tag = 'input window, operand 2, single buffered']
    #allocation8 [shape = 'u8[32768]{0}', space=vmem, size = 0x8000, scoped, tag = 'input window, operand 3, single buffered']
    #allocation9 [shape = 's32[1]{0}', space=sflag, size = 0x4, scoped, tag = 'scoped memory for tpu_custom_call.1']
    #allocation10 [shape = 'u8[512]{0}', space=vmem, size = 0x400, scoped, tag = 'input window, operand 4, single buffered']
    #allocation11 [shape = 'u8[32768]{0}', space=vmem, size = 0x8000, scoped, tag = 'input window, operand 5, single buffered']
    #allocation12 [shape = 's32[1]{0}', space=sflag, size = 0x4, scoped, tag = 'scoped memory for tpu_custom_call.1']
    #allocation13 [shape = 'u8[512]{0}', space=vmem, size = 0x400, scoped, tag = 'input window, operand 6, single buffered']
    #allocation14 [shape = 'u8[4096]{0}', space=vmem, size = 0x1000, scoped, tag = 'output window, operand 0, single buffered']
    %12 = vsyncpa [#allocation3], 0
    %13 = vsyncpa [#allocation6], 0
    %14 = vsyncpa [#allocation9], 0
    %15 = vsyncpa [#allocation12], 0
    %16 = vsyncpa [#allocation4], 0
    // Predicated region
    $region2: #{tpu_custom_call.1} parent=1 // pred_check
      _
    $region3: #{tpu_custom_call.1} parent=1 // pred_check_branch
      %18 = sbr.rel (0) target = $region5
    $region4: #{tpu_custom_call.1} parent=1 // pred_region
      %s20 = ssub.s32 128, 128
      %21 = vsyncadd [#allocation3], %s20
      %s23 = sshll.u32 [#allocation2], 4
      %s24 = int_to_ptr.vmem [resolvable:$true] %s23
      %26 = dma.hbm_to_vmem [thread:$0]  %s0, 128, %s24, [#allocation3]
    $region5: #{tpu_custom_call.1} parent=1 // pred_fallthru
      _
    // Predicated region
    $region6: #{tpu_custom_call.1} parent=1 // pred_check
      _
    $region7: #{tpu_custom_call.1} parent=1 // pred_check_branch
      %28 = sbr.rel (0) target = $region9
    $region8: #{tpu_custom_call.1} parent=1 // pred_region
      %s30 = ssub.s32 1024, 1024
      %31 = vsyncadd [#allocation6], %s30
      %s32 = sshll.u32 [#allocation5], 4
      %s33 = int_to_ptr.vmem [resolvable:$true] %s32
      %38 = dma.hbm_to_vmem [thread:$0]  %s1, 1024, %s33, [#allocation6], 64, 64, 4
    $region9: #{tpu_custom_call.1} parent=1 // pred_fallthru
      _
    // Predicated region
    $region10: #{tpu_custom_call.1} parent=1 // pred_check
      _
    $region11: #{tpu_custom_call.1} parent=1 // pred_check_branch
      %40 = sbr.rel (0) target = $region13
    $region12: #{tpu_custom_call.1} parent=1 // pred_region
      %s42 = ssub.s32 16, 16
      %43 = vsyncadd [#allocation6], %s42
      %s45 = sshll.u32 [#allocation7], 4
      %s46 = int_to_ptr.vmem [resolvable:$true] %s45
      %48 = dma.hbm_to_vmem [thread:$0]  %s2, 16, %s46, [#allocation6]
    $region13: #{tpu_custom_call.1} parent=1 // pred_fallthru
      _
    // Predicated region
    $region14: #{tpu_custom_call.1} parent=1 // pred_check
      _
    $region15: #{tpu_custom_call.1} parent=1 // pred_check_branch
      %50 = sbr.rel (0) target = $region17
    $region16: #{tpu_custom_call.1} parent=1 // pred_region
      %s52 = ssub.s32 1024, 1024
      %53 = vsyncadd [#allocation9], %s52
      %s54 = sshll.u32 [#allocation8], 4
      %s55 = int_to_ptr.vmem [resolvable:$true] %s54
      %60 = dma.hbm_to_vmem [thread:$0]  %s3, 1024, %s55, [#allocation9], 64, 64, 4
    $region17: #{tpu_custom_call.1} parent=1 // pred_fallthru
      _
    // Predicated region
    $region18: #{tpu_custom_call.1} parent=1 // pred_check
      _
    $region19: #{tpu_custom_call.1} parent=1 // pred_check_branch
      %62 = sbr.rel (0) target = $region21
    $region20: #{tpu_custom_call.1} parent=1 // pred_region
      %s64 = ssub.s32 16, 16
      %65 = vsyncadd [#allocation9], %s64
      %s67 = sshll.u32 [#allocation10], 4
      %s68 = int_to_ptr.vmem [resolvable:$true] %s67
      %70 = dma.hbm_to_vmem [thread:$0]  %s4, 16, %s68, [#allocation9]
    $region21: #{tpu_custom_call.1} parent=1 // pred_fallthru
      _
    // Predicated region
    $region22: #{tpu_custom_call.1} parent=1 // pred_check
      _
    $region23: #{tpu_custom_call.1} parent=1 // pred_check_branch
      %72 = sbr.rel (0) target = $region25
    $region24: #{tpu_custom_call.1} parent=1 // pred_region
      %s74 = ssub.s32 1024, 1024
      %75 = vsyncadd [#allocation12], %s74
      %s76 = sshll.u32 [#allocation11], 4
      %s77 = int_to_ptr.vmem [resolvable:$true] %s76
      %82 = dma.hbm_to_vmem [thread:$0]  %s5, 1024, %s77, [#allocation12], 64, 64, 4
    $region25: #{tpu_custom_call.1} parent=1 // pred_fallthru
      _
    // Predicated region
    $region26: #{tpu_custom_call.1} parent=1 // pred_check
      _
    $region27: #{tpu_custom_call.1} parent=1 // pred_check_branch
      %84 = sbr.rel (0) target = $region29
    $region28: #{tpu_custom_call.1} parent=1 // pred_region
      %s86 = ssub.s32 16, 16
      %87 = vsyncadd [#allocation12], %s86
      %s89 = sshll.u32 [#allocation13], 4
      %s90 = int_to_ptr.vmem [resolvable:$true] %s89
      %92 = dma.hbm_to_vmem [thread:$0]  %s6, 16, %s90, [#allocation12]
    $region29: #{tpu_custom_call.1} parent=1 // pred_fallthru
      _
    // Predicated region
    $region30: #{tpu_custom_call.1} parent=1 // pred_check
      _
    $region31: #{tpu_custom_call.1} parent=1 // pred_check_branch
      %94 = sbr.rel (0) target = $region33
    $region32: #{tpu_custom_call.1} parent=1 // pred_region
      %95 = dma.done [#allocation3], 128
    $region33: #{tpu_custom_call.1} parent=1 // pred_fallthru
      _
    // Predicated region
    $region34: #{tpu_custom_call.1} parent=1 // pred_check
      _
    $region35: #{tpu_custom_call.1} parent=1 // pred_check_branch
      %97 = sbr.rel (0) target = $region37
    $region36: #{tpu_custom_call.1} parent=1 // pred_region
      %98 = dma.done [#allocation6], 1024
    $region37: #{tpu_custom_call.1} parent=1 // pred_fallthru
      _
    // Predicated region
    $region38: #{tpu_custom_call.1} parent=1 // pred_check
      _
    $region39: #{tpu_custom_call.1} parent=1 // pred_check_branch
      %100 = sbr.rel (0) target = $region41
    $region40: #{tpu_custom_call.1} parent=1 // pred_region
      %101 = dma.done [#allocation6], 16
    $region41: #{tpu_custom_call.1} parent=1 // pred_fallthru
      _
    // Predicated region
    $region42: #{tpu_custom_call.1} parent=1 // pred_check
      _
    $region43: #{tpu_custom_call.1} parent=1 // pred_check_branch
      %103 = sbr.rel (0) target = $region45
    $region44: #{tpu_custom_call.1} parent=1 // pred_region
      %104 = dma.done [#allocation9], 1024
    $region45: #{tpu_custom_call.1} parent=1 // pred_fallthru
      _
    // Predicated region
    $region46: #{tpu_custom_call.1} parent=1 // pred_check
      _
    $region47: #{tpu_custom_call.1} parent=1 // pred_check_branch
      %106 = sbr.rel (0) target = $region49
    $region48: #{tpu_custom_call.1} parent=1 // pred_region
      %107 = dma.done [#allocation9], 16
    $region49: #{tpu_custom_call.1} parent=1 // pred_fallthru
      _
    // Predicated region
    $region50: #{tpu_custom_call.1} parent=1 // pred_check
      _
    $region51: #{tpu_custom_call.1} parent=1 // pred_check_branch
      %109 = sbr.rel (0) target = $region53
    $region52: #{tpu_custom_call.1} parent=1 // pred_region
      %110 = dma.done [#allocation12], 1024
    $region53: #{tpu_custom_call.1} parent=1 // pred_fallthru
      _
    // Predicated region
    $region54: #{tpu_custom_call.1} parent=1 // pred_check
      _
    $region55: #{tpu_custom_call.1} parent=1 // pred_check_branch
      %112 = sbr.rel (0) target = $region57
    $region56: #{tpu_custom_call.1} parent=1 // pred_region
      %113 = dma.done [#allocation12], 16
    $region57: #{tpu_custom_call.1} parent=1 // pred_fallthru
      _
    %v115 = vld [vmem:[#allocation2] sm:$0xff]
    %v116 = vpack.c.bf16 %v115, %v115
    %v117 = vld [vmem:[#allocation5] sm:$0xf]
    %v118 = vld [vmem:[#allocation5 + $0x4] sm:$0xf]
    %v119 = vld [vmem:[#allocation5 + $0x8] sm:$0xf]
    %v120 = vld [vmem:[#allocation5 + $0xc] sm:$0xf]
    %v121 = vld [vmem:[#allocation5 + $0x10] sm:$0xf]
    %v122 = vld [vmem:[#allocation5 + $0x14] sm:$0xf]
    %v123 = vld [vmem:[#allocation5 + $0x18] sm:$0xf]
    %v124 = vld [vmem:[#allocation5 + $0x1c] sm:$0xf]
    %v125 = vld [vmem:[#allocation5 + $0x20] sm:$0xf]
    %v126 = vld [vmem:[#allocation5 + $0x24] sm:$0xf]
    %v127 = vld [vmem:[#allocation5 + $0x28] sm:$0xf]
    %v128 = vld [vmem:[#allocation5 + $0x2c] sm:$0xf]
    %v129 = vld [vmem:[#allocation5 + $0x30] sm:$0xf]
    %v130 = vld [vmem:[#allocation5 + $0x34] sm:$0xf]
    %v131 = vld [vmem:[#allocation5 + $0x38] sm:$0xf]
    %v132 = vld [vmem:[#allocation5 + $0x3c] sm:$0xf]
    %v133 = vld [vmem:[#allocation7] sm:$0x1]
    %v135 = vlaneseq
    %v136 = vshrl.u32 %v135, 7
    %v137 = vsub.s32 0, %v136
    %v138 = vrot.slane %v133, %v137
    %v156 = vunpack.c.l.b16 %v117
    %v157 = vunpack.c.l.b16 %v118
    %v158 = vunpack.c.l.b16 %v119
    %v159 = vunpack.c.l.b16 %v120
    %v160 = vunpack.c.l.b16 %v121
    %v161 = vunpack.c.l.b16 %v122
    %v162 = vunpack.c.l.b16 %v123
    %v163 = vunpack.c.l.b16 %v124
    %v164 = vunpack.c.l.b16 %v125
    %v165 = vunpack.c.l.b16 %v126
    %v166 = vunpack.c.l.b16 %v127
    %v167 = vunpack.c.l.b16 %v128
    %v168 = vunpack.c.l.b16 %v129
    %v169 = vunpack.c.l.b16 %v130
    %v170 = vunpack.c.l.b16 %v131
    %v171 = vunpack.c.l.b16 %v132
    %v172 = vpack.c.b16 %v157, %v156
    %v173 = vpack.c.b16 %v159, %v158
    %v174 = vpack.c.b16 %v161, %v160
    %v175 = vpack.c.b16 %v163, %v162
    %v176 = vpack.c.b16 %v165, %v164
    %v177 = vpack.c.b16 %v167, %v166
    %v178 = vpack.c.b16 %v169, %v168
    %v179 = vpack.c.b16 %v171, %v170
    %188 = vmatprep.subr.bf16.mxu0 0
    %189 = vmatpush1.bf16.msra.mxu0 %v172
    %190 = vmatprep.subr.bf16.mxu0 0
    %191 = vmatpush1.bf16.msra.mxu0 %v173
    %192 = vmatprep.subr.bf16.mxu0 0
    %193 = vmatpush1.bf16.msra.mxu0 %v174
    %194 = vmatprep.subr.bf16.mxu0 0
    %195 = vmatpush1.bf16.msra.mxu0 %v175
    %196 = vmatprep.subr.bf16.mxu0 0
    %197 = vmatpush1.bf16.msra.mxu0 %v176
    %198 = vmatprep.subr.bf16.mxu0 0
    %199 = vmatpush1.bf16.msra.mxu0 %v177
    %200 = vmatprep.subr.bf16.mxu0 0
    %201 = vmatpush1.bf16.msra.mxu0 %v178
    %202 = vmatprep.subr.bf16.mxu0 0
    %203 = vmatpush1.bf16.msra.mxu0 %v179
    %204 = vmatprep.subr.bf16.mxu0 0
    %205 = vmatpush1.bf16.msra.mxu0 0
    %206 = vmatprep.subr.bf16.mxu0 0
    %207 = vmatpush1.bf16.msra.mxu0 0
    %208 = vmatprep.subr.bf16.mxu0 0
    %209 = vmatpush1.bf16.msra.mxu0 0
    %210 = vmatprep.subr.bf16.mxu0 0
    %211 = vmatpush1.bf16.msra.mxu0 0
    %212 = vmatprep.subr.bf16.mxu0 0
    %213 = vmatpush1.bf16.msra.mxu0 0
    %214 = vmatprep.subr.bf16.mxu0 0
    %215 = vmatpush1.bf16.msra.mxu0 0
    %216 = vmatprep.subr.bf16.mxu0 0
    %217 = vmatpush1.bf16.msra.mxu0 0
    %218 = vmatprep.subr.bf16.mxu0 0
    %219 = vmatpush1.bf16.msra.mxu0 0
    %220 = vmatprep.mubr.bf16.mxu0 0
    %221 = vmatmul.mubr.bf16.gmra.mrb[0].mxu0 %v116
    %v222 = vpop.f32.mrb[0].mxu0
    %v223 = vadd.f32 %v138, %v222
    %v224 = vpop.f32.mrb[0].mxu0
    %v225 = vpop.f32.mrb[0].mxu0
    %v226 = vpop.f32.mrb[0].mxu0
    %227 = vdwg.mxu0
    %v228 = vmax.f32 %v223, 0.0
    %v229 = vpack.c.bf16 %v228, %v228
    %v230 = vld [vmem:[#allocation8] sm:$0xf]
    %v231 = vld [vmem:[#allocation8 + $0x4] sm:$0xf]
    %v232 = vld [vmem:[#allocation8 + $0x8] sm:$0xf]
    %v233 = vld [vmem:[#allocation8 + $0xc] sm:$0xf]
    %v234 = vld [vmem:[#allocation8 + $0x10] sm:$0xf]
    %v235 = vld [vmem:[#allocation8 + $0x14] sm:$0xf]
    %v236 = vld [vmem:[#allocation8 + $0x18] sm:$0xf]
    %v237 = vld [vmem:[#allocation8 + $0x1c] sm:$0xf]
    %v238 = vld [vmem:[#allocation8 + $0x20] sm:$0xf]
    %v239 = vld [vmem:[#allocation8 + $0x24] sm:$0xf]
    %v240 = vld [vmem:[#allocation8 + $0x28] sm:$0xf]
    %v241 = vld [vmem:[#allocation8 + $0x2c] sm:$0xf]
    %v242 = vld [vmem:[#allocation8 + $0x30] sm:$0xf]
    %v243 = vld [vmem:[#allocation8 + $0x34] sm:$0xf]
    %v244 = vld [vmem:[#allocation8 + $0x38] sm:$0xf]
    %v245 = vld [vmem:[#allocation8 + $0x3c] sm:$0xf]
    %v246 = vld [vmem:[#allocation10] sm:$0x1]
    %v248 = vlaneseq
    %v249 = vshrl.u32 %v248, 7
    %v250 = vsub.s32 0, %v249
    %v251 = vrot.slane %v246, %v250
    %v269 = vunpack.c.l.b16 %v230
    %v270 = vunpack.c.l.b16 %v231
    %v271 = vunpack.c.l.b16 %v232
    %v272 = vunpack.c.l.b16 %v233
    %v273 = vunpack.c.l.b16 %v234
    %v274 = vunpack.c.l.b16 %v235
    %v275 = vunpack.c.l.b16 %v236
    %v276 = vunpack.c.l.b16 %v237
    %v277 = vunpack.c.l.b16 %v238
    %v278 = vunpack.c.l.b16 %v239
    %v279 = vunpack.c.l.b16 %v240
    %v280 = vunpack.c.l.b16 %v241
    %v281 = vunpack.c.l.b16 %v242
    %v282 = vunpack.c.l.b16 %v243
    %v283 = vunpack.c.l.b16 %v244
    %v284 = vunpack.c.l.b16 %v245
    %v285 = vpack.c.b16 %v270, %v269
    %v286 = vpack.c.b16 %v272, %v271
    %v287 = vpack.c.b16 %v274, %v273
    %v288 = vpack.c.b16 %v276, %v275
    %v289 = vpack.c.b16 %v278, %v277
    %v290 = vpack.c.b16 %v280, %v279
    %v291 = vpack.c.b16 %v282, %v281
    %v292 = vpack.c.b16 %v284, %v283
    %301 = vmatprep.subr.bf16.mxu0 0
    %302 = vmatpush1.bf16.msra.mxu0 %v285
    %303 = vmatprep.subr.bf16.mxu0 0
    %304 = vmatpush1.bf16.msra.mxu0 %v286
    %305 = vmatprep.subr.bf16.mxu0 0
    %306 = vmatpush1.bf16.msra.mxu0 %v287
    %307 = vmatprep.subr.bf16.mxu0 0
    %308 = vmatpush1.bf16.msra.mxu0 %v288
    %309 = vmatprep.subr.bf16.mxu0 0
    %310 = vmatpush1.bf16.msra.mxu0 %v289
    %311 = vmatprep.subr.bf16.mxu0 0
    %312 = vmatpush1.bf16.msra.mxu0 %v290
    %313 = vmatprep.subr.bf16.mxu0 0
    %314 = vmatpush1.bf16.msra.mxu0 %v291
    %315 = vmatprep.subr.bf16.mxu0 0
    %316 = vmatpush1.bf16.msra.mxu0 %v292
    %317 = vmatprep.subr.bf16.mxu0 0
    %318 = vmatpush1.bf16.msra.mxu0 0
    %319 = vmatprep.subr.bf16.mxu0 0
    %320 = vmatpush1.bf16.msra.mxu0 0
    %321 = vmatprep.subr.bf16.mxu0 0
    %322 = vmatpush1.bf16.msra.mxu0 0
    %323 = vmatprep.subr.bf16.mxu0 0
    %324 = vmatpush1.bf16.msra.mxu0 0
    %325 = vmatprep.subr.bf16.mxu0 0
    %326 = vmatpush1.bf16.msra.mxu0 0
    %327 = vmatprep.subr.bf16.mxu0 0
    %328 = vmatpush1.bf16.msra.mxu0 0
    %329 = vmatprep.subr.bf16.mxu0 0
    %330 = vmatpush1.bf16.msra.mxu0 0
    %331 = vmatprep.subr.bf16.mxu0 0
    %332 = vmatpush1.bf16.msra.mxu0 0
    %333 = vmatprep.mubr.bf16.mxu0 0
    %334 = vmatmul.mubr.bf16.gmra.mrb[0].mxu0 %v229
    %v335 = vpop.f32.mrb[0].mxu0
    %v336 = vadd.f32 %v251, %v335
    %v337 = vpop.f32.mrb[0].mxu0
    %v338 = vpop.f32.mrb[0].mxu0
    %v339 = vpop.f32.mrb[0].mxu0
    %340 = vdwg.mxu0
    %v341 = vmax.f32 %v336, 0.0
    %v342 = vpack.c.bf16 %v341, %v341
    %v343 = vld [vmem:[#allocation11] sm:$0xf]
    %v344 = vld [vmem:[#allocation11 + $0x4] sm:$0xf]
    %v345 = vld [vmem:[#allocation11 + $0x8] sm:$0xf]
    %v346 = vld [vmem:[#allocation11 + $0xc] sm:$0xf]
    %v347 = vld [vmem:[#allocation11 + $0x10] sm:$0xf]
    %v348 = vld [vmem:[#allocation11 + $0x14] sm:$0xf]
    %v349 = vld [vmem:[#allocation11 + $0x18] sm:$0xf]
    %v350 = vld [vmem:[#allocation11 + $0x1c] sm:$0xf]
    %v351 = vld [vmem:[#allocation11 + $0x20] sm:$0xf]
    %v352 = vld [vmem:[#allocation11 + $0x24] sm:$0xf]
    %v353 = vld [vmem:[#allocation11 + $0x28] sm:$0xf]
    %v354 = vld [vmem:[#allocation11 + $0x2c] sm:$0xf]
    %v355 = vld [vmem:[#allocation11 + $0x30] sm:$0xf]
    %v356 = vld [vmem:[#allocation11 + $0x34] sm:$0xf]
    %v357 = vld [vmem:[#allocation11 + $0x38] sm:$0xf]
    %v358 = vld [vmem:[#allocation11 + $0x3c] sm:$0xf]
    %v359 = vld [vmem:[#allocation13] sm:$0x1]
    %v361 = vlaneseq
    %v362 = vshrl.u32 %v361, 7
    %v363 = vsub.s32 0, %v362
    %v364 = vrot.slane %v359, %v363
    %v382 = vunpack.c.l.b16 %v343
    %v383 = vunpack.c.l.b16 %v344
    %v384 = vunpack.c.l.b16 %v345
    %v385 = vunpack.c.l.b16 %v346
    %v386 = vunpack.c.l.b16 %v347
    %v387 = vunpack.c.l.b16 %v348
    %v388 = vunpack.c.l.b16 %v349
    %v389 = vunpack.c.l.b16 %v350
    %v390 = vunpack.c.l.b16 %v351
    %v391 = vunpack.c.l.b16 %v352
    %v392 = vunpack.c.l.b16 %v353
    %v393 = vunpack.c.l.b16 %v354
    %v394 = vunpack.c.l.b16 %v355
    %v395 = vunpack.c.l.b16 %v356
    %v396 = vunpack.c.l.b16 %v357
    %v397 = vunpack.c.l.b16 %v358
    %v398 = vpack.c.b16 %v383, %v382
    %v399 = vpack.c.b16 %v385, %v384
    %v400 = vpack.c.b16 %v387, %v386
    %v401 = vpack.c.b16 %v389, %v388
    %v402 = vpack.c.b16 %v391, %v390
    %v403 = vpack.c.b16 %v393, %v392
    %v404 = vpack.c.b16 %v395, %v394
    %v405 = vpack.c.b16 %v397, %v396
    %414 = vmatprep.subr.bf16.mxu0 0
    %415 = vmatpush1.bf16.msra.mxu0 %v398
    %416 = vmatprep.subr.bf16.mxu0 0
    %417 = vmatpush1.bf16.msra.mxu0 %v399
    %418 = vmatprep.subr.bf16.mxu0 0
    %419 = vmatpush1.bf16.msra.mxu0 %v400
    %420 = vmatprep.subr.bf16.mxu0 0
    %421 = vmatpush1.bf16.msra.mxu0 %v401
    %422 = vmatprep.subr.bf16.mxu0 0
    %423 = vmatpush1.bf16.msra.mxu0 %v402
    %424 = vmatprep.subr.bf16.mxu0 0
    %425 = vmatpush1.bf16.msra.mxu0 %v403
    %426 = vmatprep.subr.bf16.mxu0 0
    %427 = vmatpush1.bf16.msra.mxu0 %v404
    %428 = vmatprep.subr.bf16.mxu0 0
    %429 = vmatpush1.bf16.msra.mxu0 %v405
    %430 = vmatprep.subr.bf16.mxu0 0
    %431 = vmatpush1.bf16.msra.mxu0 0
    %432 = vmatprep.subr.bf16.mxu0 0
    %433 = vmatpush1.bf16.msra.mxu0 0
    %434 = vmatprep.subr.bf16.mxu0 0
    %435 = vmatpush1.bf16.msra.mxu0 0
    %436 = vmatprep.subr.bf16.mxu0 0
    %437 = vmatpush1.bf16.msra.mxu0 0
    %438 = vmatprep.subr.bf16.mxu0 0
    %439 = vmatpush1.bf16.msra.mxu0 0
    %440 = vmatprep.subr.bf16.mxu0 0
    %441 = vmatpush1.bf16.msra.mxu0 0
    %442 = vmatprep.subr.bf16.mxu0 0
    %443 = vmatpush1.bf16.msra.mxu0 0
    %444 = vmatprep.subr.bf16.mxu0 0
    %445 = vmatpush1.bf16.msra.mxu0 0
    %446 = vmatprep.mubr.bf16.mxu0 0
    %447 = vmatmul.mubr.bf16.gmra.mrb[0].mxu0 %v342
    %v448 = vpop.f32.mrb[0].mxu0
    %v449 = vadd.f32 %v364, %v448
    %v450 = vpop.f32.mrb[0].mxu0
    %v451 = vpop.f32.mrb[0].mxu0
    %v452 = vpop.f32.mrb[0].mxu0
    %453 = vdwg.mxu0
    %454 = vst [vmem:[#allocation14] sm:$0xff] %v449
    // Predicated region
    $region58: #{tpu_custom_call.1} parent=1 // pred_check
      _
    $region59: #{tpu_custom_call.1} parent=1 // pred_check_branch
      %456 = sbr.rel (0) target = $region61
    $region60: #{tpu_custom_call.1} parent=1 // pred_region
      %s458 = ssub.s32 128, 128
      %459 = vsyncadd [#allocation4], %s458
      %s461 = sshll.u32 [#allocation14], 4
      %s462 = int_to_ptr.vmem [resolvable:$true] %s461
      %464 = dma.vmem_to_hbm [thread:$0]  %s462, 128, %s7, [#allocation4]
    $region61: #{tpu_custom_call.1} parent=1 // pred_fallthru
      _
    // Predicated region
    $region62: #{tpu_custom_call.1} parent=1 // pred_check
      _
    $region63: #{tpu_custom_call.1} parent=1 // pred_check_branch
      %466 = sbr.rel (0) target = $region65
    $region64: #{tpu_custom_call.1} parent=1 // pred_region
      %467 = dma.done [#allocation4], 128
    $region65: #{tpu_custom_call.1} parent=1 // pred_fallthru
      _
    %468 = vsyncpa [#allocation3], 1
    %469 = vsyncpa [#allocation6], 1
    %470 = vsyncpa [#allocation9], 1
    %471 = vsyncpa [#allocation12], 1
    %472 = vsyncpa [#allocation4], 1

</llo_original>
